<compile_context>
chip_gen: v6e
topology: v6e:2x2x1
jax: 0.10.0
libtpu: 0.0.40
codegen_flags: <defaults>
</compile_context>

<pallas_src>
import math

import jax
import jax.numpy as jnp
from jax.experimental import pallas as pl
from jax.experimental.pallas import tpu as pltpu


def _dyt_kernel(alpha_ref, gamma_ref, beta_ref, x_ref, o_ref):
    # alpha_ref: SMEM f32 scalar (1,) ; gamma/beta: (1, tile_d) VMEM ;
    # x/o: (tile_rows, tile_d) VMEM.
    a = alpha_ref[0]                                   # f32 scalar
    x = x_ref[...]
    # elementwise hot path: tanh on EUP, scale/shift on VPU
    y = gamma_ref[...] * jnp.tanh(a * x) + beta_ref[...]
    o_ref[...] = y.astype(o_ref.dtype)


def dynamic_tanh(x, alpha, gamma, beta, *,
                 target_block_bytes=4 * 1024 * 1024,
                 max_tile_d=2048,
                 vmem_limit_bytes=48 * 1024 * 1024):
    """Applies y = gamma * tanh(alpha * x) + beta over the last axis of x."""
    orig_shape = x.shape
    d = orig_shape[-1]
    itemsize = jnp.dtype(x.dtype).itemsize
    n_elems = x.size
    rows = n_elems // d

    x2 = x.reshape(rows, d)
    gamma2 = jnp.asarray(gamma, x.dtype).reshape(1, d)
    beta2 = jnp.asarray(beta, x.dtype).reshape(1, d)
    alpha1 = jnp.asarray(alpha, jnp.float32).reshape(1)

    # --- lane-dense folding: make the last dim a multiple of 128 when possible.
    d_eff = d
    if d % 128 != 0:
        k = math.lcm(d, 128) // d
        if rows % k == 0:
            d_eff = k * d
            rows = rows // k
            x2 = x2.reshape(rows, d_eff)
            gamma2 = jnp.tile(gamma2, (1, k))
            beta2 = jnp.tile(beta2, (1, k))

    # --- pick tile over the lane (embedding) axis.
    if d_eff % 128 == 0:
        tile_d = min(d_eff, max_tile_d)        # multiple of 128
    else:
        tile_d = d_eff                         # full dim (small, unfoldable case)

    # --- pick row tile so the block is ~target_block_bytes (multiple of 8 rows).
    if rows <= 8:
        tile_rows = rows                       # full dim satisfies (8,128) rule
    else:
        tr = max(8, (target_block_bytes // (tile_d * itemsize)) // 8 * 8)
        tile_rows = int(min(tr, (rows // 8) * 8))

    grid = (pl.cdiv(rows, tile_rows), pl.cdiv(d_eff, tile_d))

    cost = pl.CostEstimate(
        flops=2 * n_elems,
        transcendentals=n_elems,
        bytes_accessed=2 * n_elems * itemsize,
    )

    out = pl.pallas_call(
        _dyt_kernel,
        out_shape=jax.ShapeDtypeStruct((rows, d_eff), x.dtype),
        grid_spec=pltpu.PrefetchScalarGridSpec(
            num_scalar_prefetch=0,
            grid=grid,
            in_specs=[
                pl.BlockSpec(memory_space=pltpu.MemorySpace.SMEM),        # alpha
                pl.BlockSpec((1, tile_d), lambda i, j: (0, j)),           # gamma
                pl.BlockSpec((1, tile_d), lambda i, j: (0, j)),           # beta
                pl.BlockSpec((tile_rows, tile_d), lambda i, j: (i, j)),   # x tile
            ],
            out_specs=pl.BlockSpec((tile_rows, tile_d), lambda i, j: (i, j)),
        ),
        compiler_params=pltpu.CompilerParams(
            dimension_semantics=("parallel", "parallel"),
            vmem_limit_bytes=vmem_limit_bytes,
        ),
        cost_estimate=cost,
    )(alpha1, gamma2, beta2, x2)

    return out.reshape(orig_shape)


if __name__ == "__main__":
    # DynamicTanh(embed_dim=32, alpah_init=0.5) with deterministic params
    batch, seq, embed_dim = 2, 8, 32
    alpha_init = 0.5

    key = jax.random.PRNGKey(0)
    x = jax.random.normal(key, (batch, seq, embed_dim), dtype=jnp.float32)

    # parameter init mirrors the PyTorch module's __init__
    alpha = jnp.ones((1,), dtype=jnp.float32) * alpha_init   # nn.Parameter(torch.ones(1)*alpah_init)
    gamma = jnp.ones((embed_dim,), dtype=jnp.float32)        # nn.Parameter(torch.ones(embed_dim))
    beta = jnp.zeros((embed_dim,), dtype=jnp.float32)        # nn.Parameter(torch.zeros(embed_dim))

    y = dynamic_tanh(x, alpha, gamma, beta)
    jax.block_until_ready(y)

    # reference check in plain JAX
    y_ref = gamma * jnp.tanh(alpha * x) + beta
    assert jnp.allclose(y, y_ref, atol=1e-6, rtol=1e-6), "mismatch vs reference"

    # sanity check on a larger, non-divisible shape (exercises partial blocks)
    x_big = jax.random.normal(jax.random.PRNGKey(1), (3, 37, 256), dtype=jnp.float32)
    g_big = jax.random.normal(jax.random.PRNGKey(2), (256,), dtype=jnp.float32)
    b_big = jax.random.normal(jax.random.PRNGKey(3), (256,), dtype=jnp.float32)
    y_big = dynamic_tanh(x_big, alpha, g_big, b_big)
    jax.block_until_ready(y_big)
    y_big_ref = g_big * jnp.tanh(alpha * x_big) + b_big
    assert jnp.allclose(y_big, y_big_ref, atol=1e-6, rtol=1e-6), "mismatch vs reference (big)"

    # TODO(synk): the module's forward prints alpha[:3] (a debug side-effect); not reproduced.
    print("KERNEL_OK")
</pallas_src>

<mosaic_0001>
module attributes {stable_mosaic.version = 11 : i64} {
  func.func @_dyt_kernel(%arg0: i32, %arg1: i32, %arg2: memref<1xf32, #tpu.memory_space<smem>>, %arg3: memref<1x128xf32, #tpu.memory_space<vmem>>, %arg4: memref<1x128xf32, #tpu.memory_space<vmem>>, %arg5: memref<4x128xf32, #tpu.memory_space<vmem>>, %arg6: memref<4x128xf32, #tpu.memory_space<vmem>>) attributes {dimension_semantics = [#tpu.dimension_semantics<parallel>, #tpu.dimension_semantics<parallel>], iteration_bounds = array<i64: 1, 1>, scalar_prefetch = 0 : i64, scratch_operands = 0 : i64, tpu.core_type = #tpu.core_type<tc>, window_params = [{transform_indices = @transform_0, window_bounds = array<i64: 1>}, {transform_indices = @transform_1, window_bounds = array<i64: 1, 128>}, {transform_indices = @transform_2, window_bounds = array<i64: 1, 128>}, {transform_indices = @transform_3, window_bounds = array<i64: 4, 128>}, {transform_indices = @transform_4, window_bounds = array<i64: 4, 128>}]} {
    %c0 = arith.constant 0 : index
    %0 = memref.load %arg2[%c0] : memref<1xf32, #tpu.memory_space<smem>>
    %c0_0 = arith.constant 0 : index
    %c0_1 = arith.constant 0 : index
    %1 = vector.load %arg5[%c0_0, %c0_1] : memref<4x128xf32, #tpu.memory_space<vmem>>, vector<4x128xf32>
    %c0_2 = arith.constant 0 : index
    %c0_3 = arith.constant 0 : index
    %2 = vector.load %arg3[%c0_2, %c0_3] : memref<1x128xf32, #tpu.memory_space<vmem>>, vector<1x128xf32>
    %3 = vector.broadcast %0 : f32 to vector<4x128xf32>
    %4 = arith.mulf %3, %1 : vector<4x128xf32>
    %5 = math.tanh %4 : vector<4x128xf32>
    %6 = vector.broadcast %2 : vector<1x128xf32> to vector<4x128xf32>
    %7 = arith.mulf %6, %5 : vector<4x128xf32>
    %c0_4 = arith.constant 0 : index
    %c0_5 = arith.constant 0 : index
    %8 = vector.load %arg4[%c0_4, %c0_5] : memref<1x128xf32, #tpu.memory_space<vmem>>, vector<1x128xf32>
    %9 = vector.broadcast %8 : vector<1x128xf32> to vector<4x128xf32>
    %10 = arith.addf %7, %9 : vector<4x128xf32>
    %c0_6 = arith.constant 0 : index
    %c0_7 = arith.constant 0 : index
    %11 = vector.load %arg6[%c0_6, %c0_7] : memref<4x128xf32, #tpu.memory_space<vmem>>, vector<4x128xf32>
    tpu.vector_store %arg6[%c0_6, %c0_7], %10 {strides = array<i32>} : memref<4x128xf32, #tpu.memory_space<vmem>>, vector<4x128xf32>,
    return
  }
  func.func @transform_0(%arg0: i32, %arg1: i32) -> i32 {
    %c0_i32 = arith.constant 0 : i32
    %c0_i32_0 = arith.constant 0 : i32
    return %c0_i32 : i32
  }
  func.func @transform_1(%arg0: i32, %arg1: i32) -> (i32, i32) {
    %c0_i32 = arith.constant 0 : i32
    %c0_i32_0 = arith.constant 0 : i32
    return %c0_i32, %arg1 : i32, i32
  }
  func.func @transform_2(%arg0: i32, %arg1: i32) -> (i32, i32) {
    %c0_i32 = arith.constant 0 : i32
    %c0_i32_0 = arith.constant 0 : i32
    return %c0_i32, %arg1 : i32, i32
  }
  func.func @transform_3(%arg0: i32, %arg1: i32) -> (i32, i32) {
    %c0_i32 = arith.constant 0 : i32
    return %arg0, %arg1 : i32, i32
  }
  func.func @transform_4(%arg0: i32, %arg1: i32) -> (i32, i32) {
    %c0_i32 = arith.constant 0 : i32
    return %arg0, %arg1 : i32, i32
  }
}

</mosaic_0001>

<llo_original>
// kernel: tpu_custom_call.1
$region0: #{tpu_custom_call.1}
  #allocation0 [shape = 'u32[]', space=smem, size = 0x4, offset = 0x4, fixed_abs, tag = 'smem constant byte address 0x4 - core index']
  #allocation1 [shape = 'u32[144,128]{1,0:T(1,128)}', space=vmem, size = 0x12000, scoped, tag = 'internal scratch']
  #allocation2 [shape = 'f32[1]{0:T(128)S(6)}', space=smem, size = 0x200, scoped, tag = 'scoped memory for tpu_custom_call.1']
  %s0 = inlined_call_operand.<no memory space> [shape: f32[1], index: 0, kind: input, shape index: {}]
  %s1 = inlined_call_operand.vmem [shape: f32[1,128], index: 1, kind: input, shape index: {}]
  %s2 = inlined_call_operand.hbm [shape: f32[1,128], index: 2, kind: input, shape index: {}]
  %s3 = inlined_call_operand.vmem [shape: f32[4,128], index: 3, kind: input, shape index: {}]
  %s4 = inlined_call_operand.hbm [shape: f32[4,128], index: 4, kind: output, shape index: {}]
  %s5 = sld [smem:[#allocation0]]
  $region30: #{tpu_custom_call.1} parent=0
    _
  %s7 = ssub.s32 1, %s5
  %s8 = scalar_select 0, %s7, %s5
  %9 = sst [smem:[#allocation2]] %s0
  $region1: #{tpu_custom_call.1} parent=0
    #allocation3 [shape = 'u8[512]{0}', space=vmem, size = 0x400, scoped, tag = 'input window, operand 2, single buffered']
    #allocation4 [shape = 's32[1]{0}', space=sflag, size = 0x4, scoped, tag = 'scoped memory for tpu_custom_call.1']
    #allocation5 [shape = 's32[1]{0}', space=sflag, size = 0x4, scoped, tag = 'scoped memory for tpu_custom_call.1']
    #allocation6 [shape = 'u8[2048]{0}', space=vmem, size = 0x800, scoped, tag = 'output window, operand 0, single buffered']
    %10 = vsyncpa [#allocation4], 0
    %11 = vsyncpa [#allocation5], 0
    // Predicated region
    $region2: #{tpu_custom_call.1} parent=1 // pred_check
      _
    $region3: #{tpu_custom_call.1} parent=1 // pred_check_branch
      %13 = sbr.rel (0) target = $region5
    $region4: #{tpu_custom_call.1} parent=1 // pred_region
      _
    $region5: #{tpu_custom_call.1} parent=1 // pred_fallthru
      _
    // Predicated region
    $region6: #{tpu_custom_call.1} parent=1 // pred_check
      _
    $region7: #{tpu_custom_call.1} parent=1 // pred_check_branch
      %15 = sbr.rel (0) target = $region9
    $region8: #{tpu_custom_call.1} parent=1 // pred_region
      _
    $region9: #{tpu_custom_call.1} parent=1 // pred_fallthru
      _
    // Predicated region
    $region10: #{tpu_custom_call.1} parent=1 // pred_check
      _
    $region11: #{tpu_custom_call.1} parent=1 // pred_check_branch
      %17 = sbr.rel (0) target = $region13
    $region12: #{tpu_custom_call.1} parent=1 // pred_region
      %s19 = ssub.s32 16, 16
      %20 = vsyncadd [#allocation4], %s19
      %s22 = sshll.u32 [#allocation3], 4
      %s23 = int_to_ptr.vmem [resolvable:$true] %s22
      %25 = dma.hbm_to_vmem [thread:$0]  %s2, 16, %s23, [#allocation4]
    $region13: #{tpu_custom_call.1} parent=1 // pred_fallthru
      _
    // Predicated region
    $region14: #{tpu_custom_call.1} parent=1 // pred_check
      _
    $region15: #{tpu_custom_call.1} parent=1 // pred_check_branch
      %27 = sbr.rel (0) target = $region17
    $region16: #{tpu_custom_call.1} parent=1 // pred_region
      _
    $region17: #{tpu_custom_call.1} parent=1 // pred_fallthru
      _
    // Predicated region
    $region18: #{tpu_custom_call.1} parent=1 // pred_check
      _
    $region19: #{tpu_custom_call.1} parent=1 // pred_check_branch
      %29 = sbr.rel (0) target = $region21
    $region20: #{tpu_custom_call.1} parent=1 // pred_region
      %30 = dma.done [#allocation4], 16
    $region21: #{tpu_custom_call.1} parent=1 // pred_fallthru
      _
    %s31 = sld [smem:[#allocation2]]
    %v32 = vld [vmem:[%s3] sm:$0xf]
    %v33 = vld [vmem:[%s1] sm:$0x1]
    %v34 = vstv %s31
    %v35 = vmul.f32 %v34, %v32
    %v36 = vtanh.pop %v35
    %v38 = vlaneseq
    %v39 = vshrl.u32 %v38, 7
    %v40 = vsub.s32 0, %v39
    %v41 = vrot.slane %v33, %v40
    %v43 = vmul.f32 %v41, %v36
    %v44 = vld [vmem:[#allocation3] sm:$0x1]
    %v46 = vlaneseq
    %v47 = vshrl.u32 %v46, 7
    %v48 = vsub.s32 0, %v47
    %v49 = vrot.slane %v44, %v48
    %v51 = vadd.f32 %v43, %v49
    %52 = vst [vmem:[#allocation6] sm:$0xf] %v51
    // Predicated region
    $region22: #{tpu_custom_call.1} parent=1 // pred_check
      _
    $region23: #{tpu_custom_call.1} parent=1 // pred_check_branch
      %54 = sbr.rel (0) target = $region25
    $region24: #{tpu_custom_call.1} parent=1 // pred_region
      %s56 = ssub.s32 64, 64
      %57 = vsyncadd [#allocation5], %s56
      %s59 = sshll.u32 [#allocation6], 4
      %s60 = int_to_ptr.vmem [resolvable:$true] %s59
      %62 = dma.vmem_to_hbm [thread:$0]  %s60, 64, %s4, [#allocation5]
    $region25: #{tpu_custom_call.1} parent=1 // pred_fallthru
      _
    // Predicated region
    $region26: #{tpu_custom_call.1} parent=1 // pred_check
      _
    $region27: #{tpu_custom_call.1} parent=1 // pred_check_branch
      %64 = sbr.rel (0) target = $region29
    $region28: #{tpu_custom_call.1} parent=1 // pred_region
      %65 = dma.done [#allocation5], 64
    $region29: #{tpu_custom_call.1} parent=1 // pred_fallthru
      _
    %66 = vsyncpa [#allocation4], 1
    %67 = vsyncpa [#allocation5], 1

</llo_original>
